<compile_context>
chip_gen: v5e
topology: v5e:2x2
jax: 0.10.0
libtpu: 0.0.40
codegen_flags: <defaults>
</compile_context>

<pallas_src>
import numpy as np
import jax
import jax.numpy as jnp
from jax.experimental import pallas as pl
from jax.experimental.pallas import tpu as pltpu


def _biclass_kernel(xT_ref, u_ref, label_ref,
                    w1_ref, b1_ref, w2_ref, b2_ref, w3_ref, b3_ref,
                    out_ref):
    # ---- MLP: batch on lanes, bf16 MXU operands, f32 accumulation ----
    xT = xT_ref[...]                                              # (D, TB) bf16
    h = jnp.tanh(jnp.dot(w1_ref[...], xT,
                         preferred_element_type=jnp.float32) + b1_ref[...])
    h = jnp.tanh(jnp.dot(w2_ref[...], h.astype(w2_ref.dtype),
                         preferred_element_type=jnp.float32) + b2_ref[...])
    logits = (jnp.dot(w3_ref[...], h.astype(w3_ref.dtype),
                      preferred_element_type=jnp.float32) + b3_ref[...])  # (2, TB)

    # ---- numerically stable log-softmax over the 2 classes (sublane rows) ----
    l0 = logits[0:1, :]
    l1 = logits[1:2, :]
    m = jnp.maximum(l0, l1)
    e0 = jnp.exp(l0 - m)
    e1 = jnp.exp(l1 - m)
    z = e0 + e1
    lse = m + jnp.log(z)
    lp0 = l0 - lse
    lp1 = l1 - lse

    # ---- Categorical sample via inverse-CDF Bernoulli:  P(1) = e1 / (e0+e1) ----
    u = u_ref[...]                                                # (1, TB) f32
    sample = (u * z) < e1                                         # (1, TB) bool

    # ---- log-prob gathers (2 classes -> pure selects, no cross-lane ops) ----
    logp_l = jnp.where(sample, lp1, lp0)                          # of the sample
    logp = jnp.where(label_ref[...] == 1, lp1, lp0)               # of the label

    # ---- single lane-dense packed store: rows = [sample, logp, logp_l, pad] ----
    out_ref[...] = jnp.concatenate(
        [sample.astype(jnp.float32), logp, logp_l,
         jnp.zeros((5, logp.shape[1]), jnp.float32)], axis=0)     # (8, TB)


def _round_up(n, m):
    return ((n + m - 1) // m) * m


def biclassification_policy(x, params, label, seed):
    """Matches BiclassificationPolicy.forward: returns (l, logp, logp_l)."""
    B, D = x.shape
    w1, b1, w2, b2, w3, b3 = params            # W: (out, in)  b: (out,)
    H1, H2 = w1.shape[0], w2.shape[0]

    # ---- batch tiling: lane-major, tiles multiple of 128 ----
    TB_MAX = 2048
    if B <= TB_MAX:
        B_pad = _round_up(B, 128)
        TB = B_pad
    else:
        TB = TB_MAX
        B_pad = _round_up(B, TB)
    grid = (B_pad // TB,)

    # ---- wrapper-side layout/dtype plumbing ----
    xT = jnp.pad(x.astype(jnp.bfloat16).T, ((0, 0), (0, B_pad - B)))       # (D, B_pad)
    if label is None:
        label_row = jnp.zeros((1, B_pad), jnp.int32)
    else:
        label_row = jnp.pad(label.astype(jnp.int32).reshape(1, B),
                            ((0, 0), (0, B_pad - B)))
    u = jax.random.uniform(jax.random.PRNGKey(seed), (1, B_pad), jnp.float32)

    w1b, w2b, w3b = (w.astype(jnp.bfloat16) for w in (w1, w2, w3))
    b1c = b1.astype(jnp.float32).reshape(H1, 1)
    b2c = b2.astype(jnp.float32).reshape(H2, 1)
    b3c = b3.astype(jnp.float32).reshape(2, 1)

    def lane_spec(rows):
        return pl.BlockSpec((rows, TB), lambda i: (0, i))

    def resident(shape):
        return pl.BlockSpec(shape, lambda i: (0, 0))

    flops = 2 * B_pad * (D * H1 + H1 * H2 + H2 * 2)
    transcendentals = B_pad * (H1 + H2 + 3)
    bytes_accessed = (xT.size * 2 + u.size * 4 + label_row.size * 4
                      + (w1b.size + w2b.size + w3b.size) * 2
                      + (b1c.size + b2c.size + b3c.size) * 4
                      + 8 * B_pad * 4)

    out = pl.pallas_call(
        _biclass_kernel,
        out_shape=jax.ShapeDtypeStruct((8, B_pad), jnp.float32),
        grid=grid,
        in_specs=[
            pl.BlockSpec((D, TB), lambda i: (0, i)),    # x^T tile
            lane_spec(1),                               # uniforms
            lane_spec(1),                               # labels
            resident(w1b.shape), resident(b1c.shape),
            resident(w2b.shape), resident(b2c.shape),
            resident(w3b.shape), resident(b3c.shape),
        ],
        out_specs=pl.BlockSpec((8, TB), lambda i: (0, i)),
        compiler_params=pltpu.CompilerParams(
            dimension_semantics=("parallel",)),
        cost_estimate=pl.CostEstimate(flops=flops,
                                      transcendentals=transcendentals,
                                      bytes_accessed=bytes_accessed),
    )(xT, u, label_row, w1b, b1c, w2b, b2c, w3b, b3c)

    l = out[0, :B].astype(jnp.int32)
    logp_l = out[2, :B]
    logp = out[1, :B] if label is not None else None
    return l, logp, logp_l


def init_params(key, input_dim, hidden_dims, output_dim=2):
    """nn.Linear-style init: uniform(+-1/sqrt(fan_in)) weights, zero biases.
    Weights stored PyTorch-style as (out_features, in_features)."""
    dims = [input_dim] + list(hidden_dims) + [output_dim]
    params = []
    for i in range(len(dims) - 1):
        key, sub = jax.random.split(key)
        bound = 1.0 / float(np.sqrt(dims[i]))
        w = jax.random.uniform(sub, (dims[i + 1], dims[i]), jnp.float32,
                               minval=-bound, maxval=bound)
        b = jnp.zeros((dims[i + 1],), jnp.float32)      # nn.init.zeros_(bias)
        params += [w, b]
    return params


if __name__ == "__main__":
    B, INPUT_DIM = 8, 32
    HIDDEN_DIMS = (32, 32)

    key = jax.random.PRNGKey(0)
    kx, kl, kp = jax.random.split(key, 3)

    x = jax.random.normal(kx, (B, INPUT_DIM), dtype=jnp.float32)
    label = jax.random.randint(kl, (B,), 0, 2, dtype=jnp.int32)
    params = init_params(kp, INPUT_DIM, HIDDEN_DIMS)

    l, logp, logp_l = biclassification_policy(x, params, label, seed=0)
    jax.block_until_ready((l, logp, logp_l))

    assert l.shape == (B,) and logp.shape == (B,) and logp_l.shape == (B,)
    assert bool(jnp.all((l == 0) | (l == 1)))
    assert bool(jnp.all(logp <= 0.0)) and bool(jnp.all(logp_l <= 0.0))
    print("KERNEL_OK")
</pallas_src>

<mosaic_0001>
module attributes {stable_mosaic.version = 11 : i64} {
  func.func @_biclass_kernel(%arg0: i32, %arg1: memref<32x128xbf16, #tpu.memory_space<vmem>>, %arg2: memref<1x128xf32, #tpu.memory_space<vmem>>, %arg3: memref<1x128xi32, #tpu.memory_space<vmem>>, %arg4: memref<32x32xbf16, #tpu.memory_space<vmem>>, %arg5: memref<32x1xf32, #tpu.memory_space<vmem>>, %arg6: memref<32x32xbf16, #tpu.memory_space<vmem>>, %arg7: memref<32x1xf32, #tpu.memory_space<vmem>>, %arg8: memref<2x32xbf16, #tpu.memory_space<vmem>>, %arg9: memref<2x1xf32, #tpu.memory_space<vmem>>, %arg10: memref<8x128xf32, #tpu.memory_space<vmem>>) attributes {dimension_semantics = [#tpu.dimension_semantics<parallel>], iteration_bounds = array<i64: 1>, scalar_prefetch = 0 : i64, scratch_operands = 0 : i64, tpu.core_type = #tpu.core_type<tc>, window_params = [{transform_indices = @transform_0, window_bounds = array<i64: 32, 128>}, {transform_indices = @transform_1, window_bounds = array<i64: 1, 128>}, {transform_indices = @transform_2, window_bounds = array<i64: 1, 128>}, {pipeline_mode = #tpu.pipeline_mode<synchronous>, transform_indices = @transform_3, window_bounds = array<i64: 32, 32>}, {pipeline_mode = #tpu.pipeline_mode<synchronous>, transform_indices = @transform_4, window_bounds = array<i64: 32, 1>}, {pipeline_mode = #tpu.pipeline_mode<synchronous>, transform_indices = @transform_5, window_bounds = array<i64: 32, 32>}, {pipeline_mode = #tpu.pipeline_mode<synchronous>, transform_indices = @transform_6, window_bounds = array<i64: 32, 1>}, {pipeline_mode = #tpu.pipeline_mode<synchronous>, transform_indices = @transform_7, window_bounds = array<i64: 2, 32>}, {pipeline_mode = #tpu.pipeline_mode<synchronous>, transform_indices = @transform_8, window_bounds = array<i64: 2, 1>}, {transform_indices = @transform_9, window_bounds = array<i64: 8, 128>}]} {
    %c0 = arith.constant 0 : index
    %c0_0 = arith.constant 0 : index
    %0 = vector.load %arg1[%c0, %c0_0] : memref<32x128xbf16, #tpu.memory_space<vmem>>, vector<32x128xbf16>
    %c0_1 = arith.constant 0 : index
    %c0_2 = arith.constant 0 : index
    %1 = vector.load %arg4[%c0_1, %c0_2] : memref<32x32xbf16, #tpu.memory_space<vmem>>, vector<32x32xbf16>
    %cst = arith.constant dense<0.000000e+00> : vector<32x128xf32>
    %2 = tpu.matmul %1, %0, %cst {dimension_numbers = #tpu.dot_dimension_numbers<[1], [0], [0], [1], [0, 0, 1, 1], [], []>} : vector<32x32xbf16>, vector<32x128xbf16>, vector<32x128xf32> -> vector<32x128xf32>
    %c0_3 = arith.constant 0 : index
    %c0_4 = arith.constant 0 : index
    %3 = vector.load %arg5[%c0_3, %c0_4] : memref<32x1xf32, #tpu.memory_space<vmem>>, vector<32x1xf32>
    %4 = vector.broadcast %3 : vector<32x1xf32> to vector<32x128xf32>
    %5 = arith.addf %2, %4 : vector<32x128xf32>
    %6 = math.tanh %5 : vector<32x128xf32>
    %c0_5 = arith.constant 0 : index
    %c0_6 = arith.constant 0 : index
    %7 = vector.load %arg6[%c0_5, %c0_6] : memref<32x32xbf16, #tpu.memory_space<vmem>>, vector<32x32xbf16>
    %8 = arith.truncf %6 : vector<32x128xf32> to vector<32x128xbf16>
    %cst_7 = arith.constant dense<0.000000e+00> : vector<32x128xf32>
    %9 = tpu.matmul %7, %8, %cst_7 {dimension_numbers = #tpu.dot_dimension_numbers<[1], [0], [0], [1], [0, 0, 1, 1], [], []>} : vector<32x32xbf16>, vector<32x128xbf16>, vector<32x128xf32> -> vector<32x128xf32>
    %c0_8 = arith.constant 0 : index
    %c0_9 = arith.constant 0 : index
    %10 = vector.load %arg7[%c0_8, %c0_9] : memref<32x1xf32, #tpu.memory_space<vmem>>, vector<32x1xf32>
    %11 = vector.broadcast %10 : vector<32x1xf32> to vector<32x128xf32>
    %12 = arith.addf %9, %11 : vector<32x128xf32>
    %13 = math.tanh %12 : vector<32x128xf32>
    %c0_10 = arith.constant 0 : index
    %c0_11 = arith.constant 0 : index
    %14 = vector.load %arg8[%c0_10, %c0_11] : memref<2x32xbf16, #tpu.memory_space<vmem>>, vector<2x32xbf16>
    %15 = arith.truncf %13 : vector<32x128xf32> to vector<32x128xbf16>
    %cst_12 = arith.constant dense<0.000000e+00> : vector<2x128xf32>
    %16 = tpu.matmul %14, %15, %cst_12 {dimension_numbers = #tpu.dot_dimension_numbers<[1], [0], [0], [1], [0, 0, 1, 1], [], []>} : vector<2x32xbf16>, vector<32x128xbf16>, vector<2x128xf32> -> vector<2x128xf32>
    %c0_13 = arith.constant 0 : index
    %c0_14 = arith.constant 0 : index
    %17 = vector.load %arg9[%c0_13, %c0_14] : memref<2x1xf32, #tpu.memory_space<vmem>>, vector<2x1xf32>
    %18 = vector.broadcast %17 : vector<2x1xf32> to vector<2x128xf32>
    %19 = arith.addf %16, %18 : vector<2x128xf32>
    %20 = vector.extract_strided_slice %19 {offsets = [0, 0], sizes = [1, 128], strides = [1, 1]} : vector<2x128xf32> to vector<1x128xf32>
    %21 = vector.extract_strided_slice %19 {offsets = [1, 0], sizes = [1, 128], strides = [1, 1]} : vector<2x128xf32> to vector<1x128xf32>
    %22 = arith.maximumf %20, %21 : vector<1x128xf32>
    %23 = arith.subf %20, %22 : vector<1x128xf32>
    %24 = math.exp %23 : vector<1x128xf32>
    %25 = arith.subf %21, %22 : vector<1x128xf32>
    %26 = math.exp %25 : vector<1x128xf32>
    %27 = arith.addf %24, %26 : vector<1x128xf32>
    %28 = math.log %27 : vector<1x128xf32>
    %29 = arith.addf %22, %28 : vector<1x128xf32>
    %30 = arith.subf %20, %29 : vector<1x128xf32>
    %31 = arith.subf %21, %29 : vector<1x128xf32>
    %c0_15 = arith.constant 0 : index
    %c0_16 = arith.constant 0 : index
    %32 = vector.load %arg2[%c0_15, %c0_16] : memref<1x128xf32, #tpu.memory_space<vmem>>, vector<1x128xf32>
    %33 = arith.mulf %32, %27 : vector<1x128xf32>
    %34 = arith.cmpf olt, %33, %26 : vector<1x128xf32>
    %35 = arith.select %34, %31, %30 : vector<1x128xi1>, vector<1x128xf32>
    %c0_17 = arith.constant 0 : index
    %c0_18 = arith.constant 0 : index
    %36 = vector.load %arg3[%c0_17, %c0_18] : memref<1x128xi32, #tpu.memory_space<vmem>>, vector<1x128xi32>
    %c1_i32 = arith.constant 1 : i32
    %37 = vector.broadcast %c1_i32 : i32 to vector<1x128xi32>
    %38 = arith.cmpi eq, %36, %37 : vector<1x128xi32>
    %39 = arith.select %38, %31, %30 : vector<1x128xi1>, vector<1x128xf32>
    %40 = arith.extui %34 : vector<1x128xi1> to vector<1x128xi32>
    %41 = arith.sitofp %40 : vector<1x128xi32> to vector<1x128xf32>
    %cst_19 = arith.constant 0.000000e+00 : f32
    %42 = vector.broadcast %cst_19 : f32 to vector<5x128xf32>
    %43 = tpu.concatenate %41, %39, %35, %42 in 0 : vector<1x128xf32>, vector<1x128xf32>, vector<1x128xf32>, vector<5x128xf32> -> vector<8x128xf32>
    %c0_20 = arith.constant 0 : index
    %c0_21 = arith.constant 0 : index
    %44 = vector.load %arg10[%c0_20, %c0_21] : memref<8x128xf32, #tpu.memory_space<vmem>>, vector<8x128xf32>
    tpu.vector_store %arg10[%c0_20, %c0_21], %43 {strides = array<i32>} : memref<8x128xf32, #tpu.memory_space<vmem>>, vector<8x128xf32>,
    return
  }
  func.func @transform_0(%arg0: i32) -> (i32, i32) {
    %c0_i32 = arith.constant 0 : i32
    %c0_i32_0 = arith.constant 0 : i32
    return %c0_i32, %arg0 : i32, i32
  }
  func.func @transform_1(%arg0: i32) -> (i32, i32) {
    %c0_i32 = arith.constant 0 : i32
    %c0_i32_0 = arith.constant 0 : i32
    return %c0_i32, %arg0 : i32, i32
  }
  func.func @transform_2(%arg0: i32) -> (i32, i32) {
    %c0_i32 = arith.constant 0 : i32
    %c0_i32_0 = arith.constant 0 : i32
    return %c0_i32, %arg0 : i32, i32
  }
  func.func @transform_3(%arg0: i32) -> (i32, i32) {
    %c0_i32 = arith.constant 0 : i32
    %c0_i32_0 = arith.constant 0 : i32
    %c0_i32_1 = arith.constant 0 : i32
    return %c0_i32, %c0_i32_0 : i32, i32
  }
  func.func @transform_4(%arg0: i32) -> (i32, i32) {
    %c0_i32 = arith.constant 0 : i32
    %c0_i32_0 = arith.constant 0 : i32
    %c0_i32_1 = arith.constant 0 : i32
    return %c0_i32, %c0_i32_0 : i32, i32
  }
  func.func @transform_5(%arg0: i32) -> (i32, i32) {
    %c0_i32 = arith.constant 0 : i32
    %c0_i32_0 = arith.constant 0 : i32
    %c0_i32_1 = arith.constant 0 : i32
    return %c0_i32, %c0_i32_0 : i32, i32
  }
  func.func @transform_6(%arg0: i32) -> (i32, i32) {
    %c0_i32 = arith.constant 0 : i32
    %c0_i32_0 = arith.constant 0 : i32
    %c0_i32_1 = arith.constant 0 : i32
    return %c0_i32, %c0_i32_0 : i32, i32
  }
  func.func @transform_7(%arg0: i32) -> (i32, i32) {
    %c0_i32 = arith.constant 0 : i32
    %c0_i32_0 = arith.constant 0 : i32
    %c0_i32_1 = arith.constant 0 : i32
    return %c0_i32, %c0_i32_0 : i32, i32
  }
  func.func @transform_8(%arg0: i32) -> (i32, i32) {
    %c0_i32 = arith.constant 0 : i32
    %c0_i32_0 = arith.constant 0 : i32
    %c0_i32_1 = arith.constant 0 : i32
    return %c0_i32, %c0_i32_0 : i32, i32
  }
  func.func @transform_9(%arg0: i32) -> (i32, i32) {
    %c0_i32 = arith.constant 0 : i32
    %c0_i32_0 = arith.constant 0 : i32
    return %c0_i32, %arg0 : i32, i32
  }
}

</mosaic_0001>

<llo_original>
// kernel: tpu_custom_call.1
$region0: #{tpu_custom_call.1}
  #allocation0 [shape = 'u32[]', space=smem, size = 0x4, offset = 0x4, fixed_abs, tag = 'smem constant byte address 0x4 - core index']
  #allocation1 [shape = 'u32[72,128]{1,0:T(1,128)}', space=vmem, size = 0x9000, scoped, tag = 'internal scratch']
  %s0 = inlined_call_operand.vmem [shape: bf16[32,128], index: 0, kind: input, shape index: {}]
  %s1 = inlined_call_operand.vmem [shape: f32[1,128], index: 1, kind: input, shape index: {}]
  %s2 = inlined_call_operand.vmem [shape: s32[1,128], index: 2, kind: input, shape index: {}]
  %s3 = inlined_call_operand.vmem [shape: bf16[32,32], index: 3, kind: input, shape index: {}]
  %s4 = inlined_call_operand.vmem [shape: f32[32,1], index: 4, kind: input, shape index: {}]
  %s5 = inlined_call_operand.vmem [shape: bf16[32,32], index: 5, kind: input, shape index: {}]
  %s6 = inlined_call_operand.vmem [shape: f32[32,1], index: 6, kind: input, shape index: {}]
  %s7 = inlined_call_operand.vmem [shape: bf16[2,32], index: 7, kind: input, shape index: {}]
  %s8 = inlined_call_operand.vmem [shape: f32[2,1], index: 8, kind: input, shape index: {}]
  %s9 = inlined_call_operand.hbm [shape: f32[8,128], index: 9, kind: output, shape index: {}]
  %s10 = sld [smem:[#allocation0]]
  $region46: #{tpu_custom_call.1} parent=0
    _
  %s12 = ssub.s32 1, %s10
  %s13 = scalar_select 0, %s12, %s10
  $region1: #{tpu_custom_call.1} parent=0
    #allocation2 [shape = 'u8[4096]{0}', space=vmem, size = 0x1000, scoped, tag = 'output window, operand 0, single buffered']
    #allocation3 [shape = 's32[1]{0}', space=sflag, size = 0x4, scoped, tag = 'scoped memory for tpu_custom_call.1']
    %14 = vsyncpa [#allocation3], 0
    // Predicated region
    $region2: #{tpu_custom_call.1} parent=1 // pred_check
      _
    $region3: #{tpu_custom_call.1} parent=1 // pred_check_branch
      %16 = sbr.rel (0) target = $region5
    $region4: #{tpu_custom_call.1} parent=1 // pred_region
      _
    $region5: #{tpu_custom_call.1} parent=1 // pred_fallthru
      _
    // Predicated region
    $region6: #{tpu_custom_call.1} parent=1 // pred_check
      _
    $region7: #{tpu_custom_call.1} parent=1 // pred_check_branch
      %18 = sbr.rel (0) target = $region9
    $region8: #{tpu_custom_call.1} parent=1 // pred_region
      _
    $region9: #{tpu_custom_call.1} parent=1 // pred_fallthru
      _
    // Predicated region
    $region10: #{tpu_custom_call.1} parent=1 // pred_check
      _
    $region11: #{tpu_custom_call.1} parent=1 // pred_check_branch
      %20 = sbr.rel (0) target = $region13
    $region12: #{tpu_custom_call.1} parent=1 // pred_region
      _
    $region13: #{tpu_custom_call.1} parent=1 // pred_fallthru
      _
    // Predicated region
    $region14: #{tpu_custom_call.1} parent=1 // pred_check
      _
    $region15: #{tpu_custom_call.1} parent=1 // pred_check_branch
      %22 = sbr.rel (0) target = $region17
    $region16: #{tpu_custom_call.1} parent=1 // pred_region
      _
    $region17: #{tpu_custom_call.1} parent=1 // pred_fallthru
      _
    // Predicated region
    $region18: #{tpu_custom_call.1} parent=1 // pred_check
      _
    $region19: #{tpu_custom_call.1} parent=1 // pred_check_branch
      %24 = sbr.rel (0) target = $region21
    $region20: #{tpu_custom_call.1} parent=1 // pred_region
      _
    $region21: #{tpu_custom_call.1} parent=1 // pred_fallthru
      _
    // Predicated region
    $region22: #{tpu_custom_call.1} parent=1 // pred_check
      _
    $region23: #{tpu_custom_call.1} parent=1 // pred_check_branch
      %26 = sbr.rel (0) target = $region25
    $region24: #{tpu_custom_call.1} parent=1 // pred_region
      _
    $region25: #{tpu_custom_call.1} parent=1 // pred_fallthru
      _
    // Predicated region
    $region26: #{tpu_custom_call.1} parent=1 // pred_check
      _
    $region27: #{tpu_custom_call.1} parent=1 // pred_check_branch
      %28 = sbr.rel (0) target = $region29
    $region28: #{tpu_custom_call.1} parent=1 // pred_region
      _
    $region29: #{tpu_custom_call.1} parent=1 // pred_fallthru
      _
    // Predicated region
    $region30: #{tpu_custom_call.1} parent=1 // pred_check
      _
    $region31: #{tpu_custom_call.1} parent=1 // pred_check_branch
      %30 = sbr.rel (0) target = $region33
    $region32: #{tpu_custom_call.1} parent=1 // pred_region
      _
    $region33: #{tpu_custom_call.1} parent=1 // pred_fallthru
      _
    // Predicated region
    $region34: #{tpu_custom_call.1} parent=1 // pred_check
      _
    $region35: #{tpu_custom_call.1} parent=1 // pred_check_branch
      %32 = sbr.rel (0) target = $region37
    $region36: #{tpu_custom_call.1} parent=1 // pred_region
      _
    $region37: #{tpu_custom_call.1} parent=1 // pred_fallthru
      _
    %v34 = vld [vmem:[%s0] sm:$0xf]
    %v35 = vld [vmem:[%s0 + $0x4] sm:$0xf]
    %v36 = vld [vmem:[%s0 + $0x8] sm:$0xf]
    %v37 = vld [vmem:[%s0 + $0xc] sm:$0xf]
    %v38 = vld [vmem:[%s3] sm:$0xf]
    %v39 = vld [vmem:[%s3 + $0x4] sm:$0xf]
    %v40 = vld [vmem:[%s3 + $0x8] sm:$0xf]
    %v41 = vld [vmem:[%s3 + $0xc] sm:$0xf]
    %v42 = vld [vmem:[%s4] sm:$0xff]
    %v43 = vld [vmem:[%s4 + $0x8] sm:$0xff]
    %v44 = vld [vmem:[%s4 + $0x10] sm:$0xff]
    %v45 = vld [vmem:[%s4 + $0x18] sm:$0xff]
    %47 = vset.pattern.permute.xlu0 0
    %48 = vperm.xlu0 %47, %v42
    %v49 = vpop.permute.xlu0 %48
    %52 = vset.pattern.permute.xlu0 0
    %53 = vperm.xlu0 %52, %v43
    %v54 = vpop.permute.xlu0 %53
    %57 = vset.pattern.permute.xlu0 0
    %58 = vperm.xlu0 %57, %v44
    %v59 = vpop.permute.xlu0 %58
    %62 = vset.pattern.permute.xlu0 0
    %63 = vperm.xlu0 %62, %v45
    %v64 = vpop.permute.xlu0 %63
    %v70 = vunpack.c.l.b16 %v38
    %v71 = vunpack.c.l.b16 %v39
    %v72 = vunpack.c.l.b16 %v40
    %v73 = vunpack.c.l.b16 %v41
    %v74 = vpack.c.b16 %v71, %v70
    %v75 = vpack.c.b16 %v73, %v72
    %v80 = vunpack.c.l.b16 %v34
    %v81 = vunpack.c.l.b16 %v35
    %v82 = vunpack.c.l.b16 %v36
    %v83 = vunpack.c.l.b16 %v37
    %v84 = vpack.c.b16 %v81, %v80
    %v85 = vpack.c.b16 %v83, %v82
    %vm88 = vcmask 261120
    %v90 = vsel %vm88, %v74, 0
    %v93 = vsel %vm88, %v75, 0
    %95 = vmatpush.bf16.msra.mxu0 0
    %96 = vmatpush.bf16.msra.mxu0 0
    %97 = vmatpush.bf16.msra.mxu0 0
    %98 = vmatpush.bf16.msra.mxu0 0
    %99 = vmatpush.bf16.msra.mxu0 0
    %100 = vmatpush.bf16.msra.mxu0 0
    %101 = vmatpush.bf16.msra.mxu0 %v85
    %102 = vmatpush.bf16.msra.mxu0 %v84
    %103 = vmatmul.bf16.gmra.mxu0 %v90
    %v104 = vpop.f32.mrf.mxu0
    %v105 = vadd.f32 %v49, %v104
    %v106 = vpop.f32.mrf.mxu0
    %v107 = vadd.f32 %v54, %v106
    %108 = vmatmul.bf16.gmra.mxu0 %v93
    %v109 = vpop.f32.mrf.mxu0
    %v110 = vadd.f32 %v59, %v109
    %v111 = vpop.f32.mrf.mxu0
    %v112 = vadd.f32 %v64, %v111
    %113 = vdwg.mxu0
    %v114 = vtanh.pop %v105
    %v115 = vtanh.pop %v107
    %v116 = vtanh.pop %v110
    %v117 = vtanh.pop %v112
    %v118 = vld [vmem:[%s5] sm:$0xf]
    %v119 = vld [vmem:[%s5 + $0x4] sm:$0xf]
    %v120 = vld [vmem:[%s5 + $0x8] sm:$0xf]
    %v121 = vld [vmem:[%s5 + $0xc] sm:$0xf]
    %v122 = vpack.c.bf16 %v115, %v114
    %v123 = vpack.c.bf16 %v117, %v116
    %v124 = vld [vmem:[%s6] sm:$0xff]
    %v125 = vld [vmem:[%s6 + $0x8] sm:$0xff]
    %v126 = vld [vmem:[%s6 + $0x10] sm:$0xff]
    %v127 = vld [vmem:[%s6 + $0x18] sm:$0xff]
    %129 = vset.pattern.permute.xlu0 0
    %130 = vperm.xlu0 %129, %v124
    %v131 = vpop.permute.xlu0 %130
    %134 = vset.pattern.permute.xlu0 0
    %135 = vperm.xlu0 %134, %v125
    %v136 = vpop.permute.xlu0 %135
    %139 = vset.pattern.permute.xlu0 0
    %140 = vperm.xlu0 %139, %v126
    %v141 = vpop.permute.xlu0 %140
    %144 = vset.pattern.permute.xlu0 0
    %145 = vperm.xlu0 %144, %v127
    %v146 = vpop.permute.xlu0 %145
    %v152 = vunpack.c.l.b16 %v118
    %v153 = vunpack.c.l.b16 %v119
    %v154 = vunpack.c.l.b16 %v120
    %v155 = vunpack.c.l.b16 %v121
    %v156 = vpack.c.b16 %v153, %v152
    %v157 = vpack.c.b16 %v155, %v154
    %v159 = vsel %vm88, %v156, 0
    %v162 = vsel %vm88, %v157, 0
    %164 = vmatpush.bf16.msra.mxu0 0
    %165 = vmatpush.bf16.msra.mxu0 0
    %166 = vmatpush.bf16.msra.mxu0 0
    %167 = vmatpush.bf16.msra.mxu0 0
    %168 = vmatpush.bf16.msra.mxu0 0
    %169 = vmatpush.bf16.msra.mxu0 0
    %170 = vmatpush.bf16.msra.mxu0 %v123
    %171 = vmatpush.bf16.msra.mxu0 %v122
    %172 = vmatmul.bf16.gmra.mxu0 %v159
    %v173 = vpop.f32.mrf.mxu0
    %v174 = vadd.f32 %v131, %v173
    %v175 = vpop.f32.mrf.mxu0
    %v176 = vadd.f32 %v136, %v175
    %177 = vmatmul.bf16.gmra.mxu0 %v162
    %v178 = vpop.f32.mrf.mxu0
    %v179 = vadd.f32 %v141, %v178
    %v180 = vpop.f32.mrf.mxu0
    %v181 = vadd.f32 %v146, %v180
    %182 = vdwg.mxu0
    %v183 = vtanh.pop %v174
    %v184 = vtanh.pop %v176
    %v185 = vtanh.pop %v179
    %v186 = vtanh.pop %v181
    %v187 = vld [vmem:[%s7] sm:$0x1]
    %v188 = vpack.c.bf16 %v184, %v183
    %v189 = vpack.c.bf16 %v186, %v185
    %v190 = vld [vmem:[%s8] sm:$0x3]
    %192 = vset.pattern.permute.xlu0 0
    %193 = vperm.xlu0 %192, %v190
    %v194 = vpop.permute.xlu0 %193
    %v197 = vsel %vm88, %v187, 0
    %199 = vmatpush.bf16.msra.mxu0 0
    %200 = vmatpush.bf16.msra.mxu0 0
    %201 = vmatpush.bf16.msra.mxu0 0
    %202 = vmatpush.bf16.msra.mxu0 0
    %203 = vmatpush.bf16.msra.mxu0 0
    %204 = vmatpush.bf16.msra.mxu0 0
    %205 = vmatpush.bf16.msra.mxu0 %v189
    %206 = vmatpush.bf16.msra.mxu0 %v188
    %207 = vmatmul.bf16.gmra.mxu0 %v197
    %v208 = vpop.f32.mrf.mxu0
    %v209 = vadd.f32 %v194, %v208
    %v210 = vpop.f32.mrf.mxu0
    %211 = vdwg.mxu0
    %v213 = vrot.slane %v209, 1
    %v215 = vmax.f32 %v209, %v213
    %v216 = vsub.f32 %v209, %v215
    %v217 = vmul.f32 %v216, 1.442695
    %v218 = vpow.pop %v217
    %v220 = vrot.slane %v215, 7
    %v222 = vsub.f32 %v209, %v220
    %v223 = vmul.f32 %v222, 1.442695
    %v224 = vpow.pop %v223
    %v226 = vrot.slane %v224, 1
    %v228 = vadd.f32 %v218, %v226
    %v229 = vlog2.pop %v228
    %v230 = vmul.f32 %v229, 0.6931472
    %v231 = vadd.f32 %v215, %v230
    %v232 = vsub.f32 %v209, %v231
    %v234 = vrot.slane %v231, 7
    %v236 = vsub.f32 %v209, %v234
    %v237 = vld [vmem:[%s1] sm:$0x1]
    %v238 = vmul.f32 %v237, %v228
    %239 = vst [vmem:[#allocation1] sm:$0xff] %v224
    %s240 = scalar_lea.vmem [#allocation1], 1
    %v241 = vld [vmem:[%s240] ss:$9 sm:$0xff]
    %vm243 = vcmp.lt.f32.partialorder %v238, %v241
    %245 = vst [vmem:[#allocation1] sm:$0xff] %v236
    %s246 = scalar_lea.vmem [#allocation1], 1
    %v247 = vld [vmem:[%s246] ss:$9 sm:$0xff]
    %v249 = vsel %vm243, %v247, %v232
    %v250 = vld [vmem:[%s2] sm:$0x1]
    %vm251 = vcmp.eq.s32.totalorder %v250, 1
    %252 = vst [vmem:[#allocation1] sm:$0xff] %v236
    %s253 = scalar_lea.vmem [#allocation1], 1
    %v254 = vld [vmem:[%s253] ss:$9 sm:$0xff]
    %v256 = vsel %vm251, %v254, %v232
    %v257 = vsel %vm243, 1, 0
    %v258 = vcvt.s32.f32 %v257
    %v260 = vperm.slane %v256, 0
    %v263 = vperm.slane %v249, 0
    %vm265 = vcmask 1040384
    %v266 = vsel %vm265, %v258, %v260
    %vm267 = vcmask 1041408
    %v268 = vsel %vm267, %v266, %v263
    %vm269 = vcmask 1042432
    %v270 = vsel %vm269, %v268, 0.0
    %271 = vst [vmem:[#allocation2] sm:$0xff] %v270
    // Predicated region
    $region38: #{tpu_custom_call.1} parent=1 // pred_check
      _
    $region39: #{tpu_custom_call.1} parent=1 // pred_check_branch
      %273 = sbr.rel (0) target = $region41
    $region40: #{tpu_custom_call.1} parent=1 // pred_region
      %275 = vsyncadd [#allocation3], 0
      %s277 = sshll.u32 [#allocation2], 4
      %s278 = int_to_ptr.vmem [resolvable:$true] %s277
      %s279 = sshll.u32 %s9, 4
      %s280 = int_to_ptr.hbm [resolvable:$true] %s279
      %282 = dma.vmem_to_hbm [thread:$0]  %s278, 128, %s280, [#allocation3]
    $region41: #{tpu_custom_call.1} parent=1 // pred_fallthru
      _
    // Predicated region
    $region42: #{tpu_custom_call.1} parent=1 // pred_check
      _
    $region43: #{tpu_custom_call.1} parent=1 // pred_check_branch
      %284 = sbr.rel (0) target = $region45
    $region44: #{tpu_custom_call.1} parent=1 // pred_region
      %286 = dma.done [#allocation3], 128
    $region45: #{tpu_custom_call.1} parent=1 // pred_fallthru
      _
    %287 = vsyncpa [#allocation3], 1

</llo_original>
